<compile_context>
chip_gen: v5e
topology: v5e:2x2
jax: 0.10.0
libtpu: 0.0.40
codegen_flags: <defaults>
</compile_context>

<pallas_src>
import functools

import jax
import jax.numpy as jnp
from jax import lax
from jax.experimental import pallas as pl
from jax.experimental.pallas import tpu as pltpu

LN_EPS = 1e-5  # torch.nn.LayerNorm default


def _round_up(x: int, m: int) -> int:
    return ((x + m - 1) // m) * m


def _pad_to(a, target_shape):
    pads = [(0, t - s) for s, t in zip(a.shape, target_shape)]
    if any(hi for _, hi in pads):
        a = jnp.pad(a, pads)
    return a


def seq_time_embed_kernel(x_ref, w_ref, b_ref, g_ref, beta_ref, o_ref, *,
                          d_out_valid: int, mm_dtype):
    # Cast activations in-kernel (VPU) instead of a separate host-side XLA
    # cast pass over HBM; weight is already in mm_dtype.
    x = x_ref[...].astype(mm_dtype)
    # Linear: y = x @ W + b   (MXU matmul, f32 accumulation).
    y = jnp.dot(x, w_ref[...], preferred_element_type=jnp.float32)
    y = y + b_ref[...]                                   # (tm, Dp) + (1, Dp)

    # Single-pass LayerNorm statistics.  Padded feature lanes of y are exactly
    # zero (zero weight columns + zero bias), so plain lane sums are correct
    # as long as we divide by the *valid* feature count.  var = E[y^2]-mean^2
    # in f32 (mild cancellation only for very large means; clamp for safety).
    inv_n = 1.0 / float(d_out_valid)
    mean = jnp.sum(y, axis=-1, keepdims=True) * inv_n
    mean_sq = jnp.sum(y * y, axis=-1, keepdims=True) * inv_n
    var = jnp.maximum(mean_sq - mean * mean, 0.0)

    y_norm = (y - mean) * lax.rsqrt(var + LN_EPS)
    # Padded lanes of gamma/beta are zero -> padded output lanes are zero.
    out = y_norm * g_ref[...] + beta_ref[...]
    o_ref[...] = out.astype(o_ref.dtype)


def seq_time_embedding(seq_embeds, weight, bias, gamma, beta, *,
                       tm: int = 512, matmul_dtype=jnp.bfloat16,
                       out_dtype=None):
    """Linear(D_in -> D_out) followed by LayerNorm(D_out).

    seq_embeds: [N, D_in]; weight: [D_in, D_out] (transposed vs torch);
    bias / gamma / beta: [D_out].

    matmul_dtype: MXU input dtype (default bf16; f32 accumulation and f32
      LayerNorm math regardless).  Pass jnp.float32 for a full-precision dot.
    out_dtype: output dtype (default: same as seq_embeds).
    """
    N, D_in = seq_embeds.shape
    assert weight.shape[0] == D_in, "weight must be [D_in, D_out]"
    D_out = weight.shape[1]
    x_dtype = seq_embeds.dtype
    out_dtype = jnp.dtype(x_dtype) if out_dtype is None else jnp.dtype(out_dtype)
    mm_dtype = jnp.dtype(matmul_dtype) if matmul_dtype is not None else jnp.dtype(x_dtype)

    # Lane-dense feature dims (multiples of 128).  Zero feature padding is
    # matmul-safe; zero-padded gamma/beta keep padded output lanes at zero.
    D_in_p = _round_up(D_in, 128)
    D_out_p = _round_up(D_out, 128)

    # Row tile: big enough to fill the MXU and amortise the ~0.35us grid-step
    # overhead, balanced across grid steps, and forced to >= 2 grid steps once
    # N > tm/2 so both v7x TensorCores get work (no effect on v5e/v6e).
    row_align = 8
    tm = _round_up(max(tm, row_align), row_align)
    num_blocks = pl.cdiv(N, tm)
    if N > tm // 2:
        num_blocks = max(num_blocks, 2)
    tm_eff = _round_up(pl.cdiv(N, num_blocks), row_align)
    grid = (pl.cdiv(N, tm_eff),)

    # Activations: no host-side cast, no row padding (Pallas masks the partial
    # last row-tile).  Only pad features with zeros when D_in is ragged, so
    # garbage K columns can never leak into the matmul.
    x_in = seq_embeds
    if D_in_p != D_in:
        x_in = jnp.pad(x_in, ((0, 0), (0, D_in_p - D_in)))

    # Parameters: padded + cast once on the host (tiny, one-time prep).
    w_p = _pad_to(weight, (D_in_p, D_out_p)).astype(mm_dtype)
    b_p = _pad_to(bias.astype(jnp.float32).reshape(1, D_out), (1, D_out_p))
    g_p = _pad_to(gamma.astype(jnp.float32).reshape(1, D_out), (1, D_out_p))
    beta_p = _pad_to(beta.astype(jnp.float32).reshape(1, D_out), (1, D_out_p))

    # Explicit VMEM budget: double-buffered x/out tiles, single-buffered
    # (grid-invariant) weight + vectors, in-kernel cast copy of x, plus
    # headroom for the f32 LayerNorm temporaries.
    x_isz = jnp.dtype(x_dtype).itemsize
    mm_isz = jnp.dtype(mm_dtype).itemsize
    out_isz = jnp.dtype(out_dtype).itemsize
    vmem_bytes = (
        2 * tm_eff * D_in_p * x_isz         # x tile (double-buffered)
        + tm_eff * D_in_p * mm_isz          # in-kernel cast copy of x
        + D_in_p * D_out_p * mm_isz         # resident weight (single-buffered)
        + 3 * D_out_p * 4                   # bias / gamma / beta
        + 2 * tm_eff * D_out_p * out_isz    # out tile (double-buffered)
        + 6 * tm_eff * D_out_p * 4          # f32 intermediates / spill headroom
    )
    # Generation-aware upper clamp: v7x has 64 MiB/TC, v5e/v6e have 128 MiB.
    try:
        info = pltpu.get_tpu_info()
        vmem_cap = int(getattr(info, "vmem_capacity_bytes", 64 << 20))
    except Exception:
        vmem_cap = 64 << 20   # conservative (v7x) if the query is unavailable
    upper = max(32 << 20, (vmem_cap * 7) // 8)
    vmem_limit = int(min(max(vmem_bytes, 32 << 20), upper))

    def const2d(shape):
        # Grid-invariant operand: constant index_map + single buffer.
        return pl.BlockSpec(shape, lambda i: (0, 0), pipeline_mode=pl.Buffered(1))

    kernel = functools.partial(seq_time_embed_kernel,
                               d_out_valid=D_out, mm_dtype=mm_dtype)

    out_p = pl.pallas_call(
        kernel,
        out_shape=jax.ShapeDtypeStruct((N, D_out_p), out_dtype),
        grid_spec=pltpu.PrefetchScalarGridSpec(
            num_scalar_prefetch=0,
            grid=grid,
            in_specs=[
                pl.BlockSpec((tm_eff, D_in_p), lambda i: (i, 0)),   # x row tile
                const2d((D_in_p, D_out_p)),                          # full weight
                const2d((1, D_out_p)),                               # bias
                const2d((1, D_out_p)),                               # ln gamma
                const2d((1, D_out_p)),                               # ln beta
            ],
            out_specs=pl.BlockSpec((tm_eff, D_out_p), lambda i: (i, 0)),
        ),
        compiler_params=pltpu.CompilerParams(
            dimension_semantics=("parallel",),
            vmem_limit_bytes=vmem_limit,
        ),
    )(x_in, w_p, b_p, g_p, beta_p)

    if D_out_p != D_out:
        out_p = out_p[:, :D_out]
    return out_p


def _reference(x, w, b, g, beta):
    y = jnp.dot(x, w, precision=lax.Precision.HIGHEST) + b
    mu = y.mean(-1, keepdims=True)
    var = ((y - mu) ** 2).mean(-1, keepdims=True)
    return (y - mu) / jnp.sqrt(var + LN_EPS) * g + beta


if __name__ == "__main__":
    # Small shapes consistent with the module: Linear(D_in -> D_out) + LayerNorm(D_out).
    N, D_in, D_out = 16, 256, 512

    key = jax.random.PRNGKey(0)
    k_x, k_w, k_b, k_g, k_be = jax.random.split(key, 5)

    x = jax.random.normal(k_x, (N, D_in), dtype=jnp.float32)
    weight = jax.random.normal(k_w, (D_in, D_out), dtype=jnp.float32) * (1.0 / D_in ** 0.5)
    bias = jax.random.normal(k_b, (D_out,), dtype=jnp.float32) * 0.01
    gamma = 1.0 + 0.1 * jax.random.normal(k_g, (D_out,), dtype=jnp.float32)
    beta = 0.05 * jax.random.normal(k_be, (D_out,), dtype=jnp.float32)

    ref = _reference(x, weight, bias, gamma, beta)

    # Default path: bf16 MXU inputs, f32 accumulation + f32 LayerNorm, f32 out.
    out = jax.block_until_ready(seq_time_embedding(x, weight, bias, gamma, beta))
    assert out.shape == (N, D_out) and out.dtype == jnp.float32
    assert jnp.allclose(out, ref, atol=5e-2, rtol=5e-2), "bf16-MXU mismatch vs reference"

    # Full-precision matmul path (tight tolerance).
    out_f32 = jax.block_until_ready(
        seq_time_embedding(x, weight, bias, gamma, beta, matmul_dtype=jnp.float32))
    assert jnp.allclose(out_f32, ref, atol=1e-3, rtol=1e-3), "f32 mismatch vs reference"

    # Narrow-output option (bf16 writeback).
    out_bf = jax.block_until_ready(
        seq_time_embedding(x, weight, bias, gamma, beta, out_dtype=jnp.bfloat16))
    assert out_bf.dtype == jnp.bfloat16
    assert jnp.allclose(out_bf.astype(jnp.float32), ref, atol=5e-2, rtol=5e-2), \
        "bf16-output mismatch vs reference"

    # Ragged shapes: odd row count + D_in/D_out not multiples of 128
    # (exercises the partial last row-tile and the padded-feature paths).
    n2, di2, do2 = 13, 200, 320
    x2, w2 = x[:n2, :di2], weight[:di2, :do2]
    b2, g2, be2 = bias[:do2], gamma[:do2], beta[:do2]
    out2 = jax.block_until_ready(
        seq_time_embedding(x2, w2, b2, g2, be2, matmul_dtype=jnp.float32))
    ref2 = _reference(x2, w2, b2, g2, be2)
    assert out2.shape == (n2, do2)
    assert jnp.allclose(out2, ref2, atol=1e-3, rtol=1e-3), "ragged-shape mismatch vs reference"

    print("KERNEL_OK")
</pallas_src>

<mosaic_0001>
module attributes {stable_mosaic.version = 11 : i64} {
  func.func @seq_time_embed_kernel(%arg0: i32, %arg1: memref<16x256xf32, #tpu.memory_space<vmem>>, %arg2: memref<256x512xbf16, #tpu.memory_space<vmem>>, %arg3: memref<1x512xf32, #tpu.memory_space<vmem>>, %arg4: memref<1x512xf32, #tpu.memory_space<vmem>>, %arg5: memref<1x512xf32, #tpu.memory_space<vmem>>, %arg6: memref<16x512xf32, #tpu.memory_space<vmem>>) attributes {dimension_semantics = [#tpu.dimension_semantics<parallel>], iteration_bounds = array<i64: 1>, scalar_prefetch = 0 : i64, scratch_operands = 0 : i64, tpu.core_type = #tpu.core_type<tc>, window_params = [{transform_indices = @transform_0, window_bounds = array<i64: 16, 256>}, {pipeline_mode = #tpu.pipeline_mode<synchronous>, transform_indices = @transform_1, window_bounds = array<i64: 256, 512>}, {pipeline_mode = #tpu.pipeline_mode<synchronous>, transform_indices = @transform_2, window_bounds = array<i64: 1, 512>}, {pipeline_mode = #tpu.pipeline_mode<synchronous>, transform_indices = @transform_3, window_bounds = array<i64: 1, 512>}, {pipeline_mode = #tpu.pipeline_mode<synchronous>, transform_indices = @transform_4, window_bounds = array<i64: 1, 512>}, {transform_indices = @transform_5, window_bounds = array<i64: 16, 512>}]} {
    %c0 = arith.constant 0 : index
    %c0_0 = arith.constant 0 : index
    %0 = vector.load %arg1[%c0, %c0_0] : memref<16x256xf32, #tpu.memory_space<vmem>>, vector<16x256xf32>
    %1 = arith.truncf %0 : vector<16x256xf32> to vector<16x256xbf16>
    %c0_1 = arith.constant 0 : index
    %c0_2 = arith.constant 0 : index
    %2 = vector.load %arg2[%c0_1, %c0_2] : memref<256x512xbf16, #tpu.memory_space<vmem>>, vector<256x512xbf16>
    %cst = arith.constant dense<0.000000e+00> : vector<16x512xf32>
    %3 = tpu.matmul %1, %2, %cst {dimension_numbers = #tpu.dot_dimension_numbers<[1], [0], [0], [1], [0, 0, 1, 1], [], []>} : vector<16x256xbf16>, vector<256x512xbf16>, vector<16x512xf32> -> vector<16x512xf32>
    %c0_3 = arith.constant 0 : index
    %c0_4 = arith.constant 0 : index
    %4 = vector.load %arg3[%c0_3, %c0_4] : memref<1x512xf32, #tpu.memory_space<vmem>>, vector<1x512xf32>
    %5 = vector.broadcast %4 : vector<1x512xf32> to vector<16x512xf32>
    %6 = arith.addf %3, %5 : vector<16x512xf32>
    %cst_5 = arith.constant dense<0.000000e+00> : vector<16xf32>
    %7 = vector.multi_reduction <add>, %6, %cst_5 [1] : vector<16x512xf32> to vector<16xf32>
    %8 = vector.shape_cast %7 : vector<16xf32> to vector<16x1xf32>
    %cst_6 = arith.constant 0.001953125 : f32
    %9 = vector.broadcast %cst_6 : f32 to vector<16x1xf32>
    %10 = arith.mulf %8, %9 : vector<16x1xf32>
    %11 = arith.mulf %6, %6 : vector<16x512xf32>
    %cst_7 = arith.constant dense<0.000000e+00> : vector<16xf32>
    %12 = vector.multi_reduction <add>, %11, %cst_7 [1] : vector<16x512xf32> to vector<16xf32>
    %13 = vector.shape_cast %12 : vector<16xf32> to vector<16x1xf32>
    %cst_8 = arith.constant 0.001953125 : f32
    %14 = vector.broadcast %cst_8 : f32 to vector<16x1xf32>
    %15 = arith.mulf %13, %14 : vector<16x1xf32>
    %16 = arith.mulf %10, %10 : vector<16x1xf32>
    %17 = arith.subf %15, %16 : vector<16x1xf32>
    %cst_9 = arith.constant 0.000000e+00 : f32
    %18 = vector.broadcast %cst_9 : f32 to vector<16x1xf32>
    %19 = arith.maximumf %17, %18 : vector<16x1xf32>
    %20 = vector.broadcast %10 : vector<16x1xf32> to vector<16x512xf32>
    %21 = arith.subf %6, %20 : vector<16x512xf32>
    %cst_10 = arith.constant 9.99999974E-6 : f32
    %22 = vector.broadcast %cst_10 : f32 to vector<16x1xf32>
    %23 = arith.addf %19, %22 : vector<16x1xf32>
    %24 = math.rsqrt %23 : vector<16x1xf32>
    %25 = vector.broadcast %24 : vector<16x1xf32> to vector<16x512xf32>
    %26 = arith.mulf %21, %25 : vector<16x512xf32>
    %c0_11 = arith.constant 0 : index
    %c0_12 = arith.constant 0 : index
    %27 = vector.load %arg4[%c0_11, %c0_12] : memref<1x512xf32, #tpu.memory_space<vmem>>, vector<1x512xf32>
    %28 = vector.broadcast %27 : vector<1x512xf32> to vector<16x512xf32>
    %29 = arith.mulf %26, %28 : vector<16x512xf32>
    %c0_13 = arith.constant 0 : index
    %c0_14 = arith.constant 0 : index
    %30 = vector.load %arg5[%c0_13, %c0_14] : memref<1x512xf32, #tpu.memory_space<vmem>>, vector<1x512xf32>
    %31 = vector.broadcast %30 : vector<1x512xf32> to vector<16x512xf32>
    %32 = arith.addf %29, %31 : vector<16x512xf32>
    %c0_15 = arith.constant 0 : index
    %c0_16 = arith.constant 0 : index
    %33 = vector.load %arg6[%c0_15, %c0_16] : memref<16x512xf32, #tpu.memory_space<vmem>>, vector<16x512xf32>
    tpu.vector_store %arg6[%c0_15, %c0_16], %32 {strides = array<i32>} : memref<16x512xf32, #tpu.memory_space<vmem>>, vector<16x512xf32>,
    return
  }
  func.func @transform_0(%arg0: i32) -> (i32, i32) {
    %c0_i32 = arith.constant 0 : i32
    %c0_i32_0 = arith.constant 0 : i32
    return %arg0, %c0_i32 : i32, i32
  }
  func.func @transform_1(%arg0: i32) -> (i32, i32) {
    %c0_i32 = arith.constant 0 : i32
    %c0_i32_0 = arith.constant 0 : i32
    %c0_i32_1 = arith.constant 0 : i32
    return %c0_i32, %c0_i32_0 : i32, i32
  }
  func.func @transform_2(%arg0: i32) -> (i32, i32) {
    %c0_i32 = arith.constant 0 : i32
    %c0_i32_0 = arith.constant 0 : i32
    %c0_i32_1 = arith.constant 0 : i32
    return %c0_i32, %c0_i32_0 : i32, i32
  }
  func.func @transform_3(%arg0: i32) -> (i32, i32) {
    %c0_i32 = arith.constant 0 : i32
    %c0_i32_0 = arith.constant 0 : i32
    %c0_i32_1 = arith.constant 0 : i32
    return %c0_i32, %c0_i32_0 : i32, i32
  }
  func.func @transform_4(%arg0: i32) -> (i32, i32) {
    %c0_i32 = arith.constant 0 : i32
    %c0_i32_0 = arith.constant 0 : i32
    %c0_i32_1 = arith.constant 0 : i32
    return %c0_i32, %c0_i32_0 : i32, i32
  }
  func.func @transform_5(%arg0: i32) -> (i32, i32) {
    %c0_i32 = arith.constant 0 : i32
    %c0_i32_0 = arith.constant 0 : i32
    return %arg0, %c0_i32 : i32, i32
  }
}

</mosaic_0001>

<llo_original>
// kernel: tpu_custom_call.1
$region0: #{tpu_custom_call.1}
  #allocation0 [shape = 'u32[]', space=smem, size = 0x4, offset = 0x4, fixed_abs, tag = 'smem constant byte address 0x4 - core index']
  #allocation1 [shape = 'u32[72,128]{1,0:T(1,128)}', space=vmem, size = 0x9000, scoped, tag = 'internal scratch']
  %s0 = inlined_call_operand.hbm [shape: f32[16,256], index: 0, kind: input, shape index: {}]
  %s1 = inlined_call_operand.hbm [shape: bf16[256,512], index: 1, kind: input, shape index: {}]
  %s2 = inlined_call_operand.hbm [shape: f32[1,512], index: 2, kind: input, shape index: {}]
  %s3 = inlined_call_operand.hbm [shape: f32[1,512], index: 3, kind: input, shape index: {}]
  %s4 = inlined_call_operand.hbm [shape: f32[1,512], index: 4, kind: input, shape index: {}]
  %s5 = inlined_call_operand.hbm [shape: f32[16,512], index: 5, kind: output, shape index: {}]
  %s6 = sld [smem:[#allocation0]]
  $region50: #{tpu_custom_call.1} parent=0
    _
  %s8 = ssub.s32 1, %s6
  %s9 = scalar_select 0, %s8, %s6
  $region1: #{tpu_custom_call.1} parent=0
    #allocation2 [shape = 'u8[16384]{0}', space=vmem, size = 0x4000, scoped, tag = 'input window, operand 0, single buffered']
    #allocation3 [shape = 's32[1]{0}', space=sflag, size = 0x4, scoped, tag = 'scoped memory for tpu_custom_call.1']
    #allocation4 [shape = 's32[1]{0}', space=sflag, size = 0x4, scoped, tag = 'scoped memory for tpu_custom_call.1']
    #allocation5 [shape = 'u8[262144]{0}', space=vmem, size = 0x40000, scoped, tag = 'input window, operand 1, single buffered']
    #allocation6 [shape = 's32[1]{0}', space=sflag, size = 0x4, scoped, tag = 'scoped memory for tpu_custom_call.1']
    #allocation7 [shape = 'u8[2048]{0}', space=vmem, size = 0x800, scoped, tag = 'input window, operand 2, single buffered']
    #allocation8 [shape = 'u8[2048]{0}', space=vmem, size = 0x800, scoped, tag = 'input window, operand 3, single buffered']
    #allocation9 [shape = 's32[1]{0}', space=sflag, size = 0x4, scoped, tag = 'scoped memory for tpu_custom_call.1']
    #allocation10 [shape = 'u8[2048]{0}', space=vmem, size = 0x800, scoped, tag = 'input window, operand 4, single buffered']
    #allocation11 [shape = 'u8[32768]{0}', space=vmem, size = 0x8000, scoped, tag = 'output window, operand 0, single buffered']
    %10 = vsyncpa [#allocation3], 0
    %11 = vsyncpa [#allocation6], 0
    %12 = vsyncpa [#allocation9], 0
    %13 = vsyncpa [#allocation4], 0
    // Predicated region
    $region2: #{tpu_custom_call.1} parent=1 // pred_check
      _
    $region3: #{tpu_custom_call.1} parent=1 // pred_check_branch
      %15 = sbr.rel (0) target = $region5
    $region4: #{tpu_custom_call.1} parent=1 // pred_region
      %17 = vsyncadd [#allocation3], 0
      %s18 = sshll.u32 %s0, 4
      %s19 = int_to_ptr.hbm [resolvable:$true] %s18
      %s20 = sshll.u32 [#allocation2], 4
      %s21 = int_to_ptr.vmem [resolvable:$true] %s20
      %26 = dma.hbm_to_vmem [thread:$0]  %s19, 512, %s21, [#allocation3], 256, 256, 16
    $region5: #{tpu_custom_call.1} parent=1 // pred_fallthru
      _
    // Predicated region
    $region6: #{tpu_custom_call.1} parent=1 // pred_check
      _
    $region7: #{tpu_custom_call.1} parent=1 // pred_check_branch
      %28 = sbr.rel (0) target = $region9
    $region8: #{tpu_custom_call.1} parent=1 // pred_region
      %30 = vsyncadd [#allocation6], 0
      %s31 = sshll.u32 %s1, 4
      %s32 = int_to_ptr.hbm [resolvable:$true] %s31
      %s33 = sshll.u32 [#allocation5], 4
      %s34 = int_to_ptr.vmem [resolvable:$true] %s33
      %39 = dma.hbm_to_vmem [thread:$0]  %s32, 8192, %s34, [#allocation6], 256, 256, 16
    $region9: #{tpu_custom_call.1} parent=1 // pred_fallthru
      _
    // Predicated region
    $region10: #{tpu_custom_call.1} parent=1 // pred_check
      _
    $region11: #{tpu_custom_call.1} parent=1 // pred_check_branch
      %41 = sbr.rel (0) target = $region13
    $region12: #{tpu_custom_call.1} parent=1 // pred_region
      %43 = vsyncadd [#allocation6], 0
      %s45 = sshll.u32 %s2, 4
      %s46 = int_to_ptr.hbm [resolvable:$true] %s45
      %s47 = sshll.u32 [#allocation7], 4
      %s48 = int_to_ptr.vmem [resolvable:$true] %s47
      %50 = dma.hbm_to_vmem [thread:$0]  %s46, 64, %s48, [#allocation6]
    $region13: #{tpu_custom_call.1} parent=1 // pred_fallthru
      _
    // Predicated region
    $region14: #{tpu_custom_call.1} parent=1 // pred_check
      _
    $region15: #{tpu_custom_call.1} parent=1 // pred_check_branch
      %52 = sbr.rel (0) target = $region17
    $region16: #{tpu_custom_call.1} parent=1 // pred_region
      %54 = vsyncadd [#allocation9], 0
      %s56 = sshll.u32 %s3, 4
      %s57 = int_to_ptr.hbm [resolvable:$true] %s56
      %s58 = sshll.u32 [#allocation8], 4
      %s59 = int_to_ptr.vmem [resolvable:$true] %s58
      %61 = dma.hbm_to_vmem [thread:$0]  %s57, 64, %s59, [#allocation9]
    $region17: #{tpu_custom_call.1} parent=1 // pred_fallthru
      _
    // Predicated region
    $region18: #{tpu_custom_call.1} parent=1 // pred_check
      _
    $region19: #{tpu_custom_call.1} parent=1 // pred_check_branch
      %63 = sbr.rel (0) target = $region21
    $region20: #{tpu_custom_call.1} parent=1 // pred_region
      %65 = vsyncadd [#allocation9], 0
      %s67 = sshll.u32 %s4, 4
      %s68 = int_to_ptr.hbm [resolvable:$true] %s67
      %s69 = sshll.u32 [#allocation10], 4
      %s70 = int_to_ptr.vmem [resolvable:$true] %s69
      %72 = dma.hbm_to_vmem [thread:$0]  %s68, 64, %s70, [#allocation9]
    $region21: #{tpu_custom_call.1} parent=1 // pred_fallthru
      _
    // Predicated region
    $region22: #{tpu_custom_call.1} parent=1 // pred_check
      _
    $region23: #{tpu_custom_call.1} parent=1 // pred_check_branch
      %74 = sbr.rel (0) target = $region25
    $region24: #{tpu_custom_call.1} parent=1 // pred_region
      %76 = dma.done [#allocation3], 512
    $region25: #{tpu_custom_call.1} parent=1 // pred_fallthru
      _
    // Predicated region
    $region26: #{tpu_custom_call.1} parent=1 // pred_check
      _
    $region27: #{tpu_custom_call.1} parent=1 // pred_check_branch
      %78 = sbr.rel (0) target = $region29
    $region28: #{tpu_custom_call.1} parent=1 // pred_region
      %80 = dma.done [#allocation6], 8192
    $region29: #{tpu_custom_call.1} parent=1 // pred_fallthru
      _
    // Predicated region
    $region30: #{tpu_custom_call.1} parent=1 // pred_check
      _
    $region31: #{tpu_custom_call.1} parent=1 // pred_check_branch
      %82 = sbr.rel (0) target = $region33
    $region32: #{tpu_custom_call.1} parent=1 // pred_region
      %84 = dma.done [#allocation6], 64
    $region33: #{tpu_custom_call.1} parent=1 // pred_fallthru
      _
    // Predicated region
    $region34: #{tpu_custom_call.1} parent=1 // pred_check
      _
    $region35: #{tpu_custom_call.1} parent=1 // pred_check_branch
      %86 = sbr.rel (0) target = $region37
    $region36: #{tpu_custom_call.1} parent=1 // pred_region
      %88 = dma.done [#allocation9], 64
    $region37: #{tpu_custom_call.1} parent=1 // pred_fallthru
      _
    // Predicated region
    $region38: #{tpu_custom_call.1} parent=1 // pred_check
      _
    $region39: #{tpu_custom_call.1} parent=1 // pred_check_branch
      %90 = sbr.rel (0) target = $region41
    $region40: #{tpu_custom_call.1} parent=1 // pred_region
      %92 = dma.done [#allocation9], 64
    $region41: #{tpu_custom_call.1} parent=1 // pred_fallthru
      _
    %v93 = vld [vmem:[#allocation2] sm:$0xff]
    %v94 = vld [vmem:[#allocation2 + $0x8] sm:$0xff]
    %v95 = vld [vmem:[#allocation2 + $0x10] sm:$0xff]
    %v96 = vld [vmem:[#allocation2 + $0x18] sm:$0xff]
    %v97 = vpack.c.bf16 %v95, %v93
    %v98 = vpack.c.bf16 %v96, %v94
    %v99 = vld [vmem:[#allocation5] sm:$0xff]
    %v100 = vld [vmem:[#allocation5 + $0x8] sm:$0xff]
    %v101 = vld [vmem:[#allocation5 + $0x10] sm:$0xff]
    %v102 = vld [vmem:[#allocation5 + $0x18] sm:$0xff]
    %v103 = vld [vmem:[#allocation5 + $0x20] sm:$0xff]
    %v104 = vld [vmem:[#allocation5 + $0x28] sm:$0xff]
    %v105 = vld [vmem:[#allocation5 + $0x30] sm:$0xff]
    %v106 = vld [vmem:[#allocation5 + $0x38] sm:$0xff]
    %v107 = vld [vmem:[#allocation5 + $0x40] sm:$0xff]
    %v108 = vld [vmem:[#allocation5 + $0x48] sm:$0xff]
    %v109 = vld [vmem:[#allocation5 + $0x50] sm:$0xff]
    %v110 = vld [vmem:[#allocation5 + $0x58] sm:$0xff]
    %v111 = vld [vmem:[#allocation5 + $0x60] sm:$0xff]
    %v112 = vld [vmem:[#allocation5 + $0x68] sm:$0xff]
    %v113 = vld [vmem:[#allocation5 + $0x70] sm:$0xff]
    %v114 = vld [vmem:[#allocation5 + $0x78] sm:$0xff]
    %v115 = vld [vmem:[#allocation5 + $0x80] sm:$0xff]
    %v116 = vld [vmem:[#allocation5 + $0x88] sm:$0xff]
    %v117 = vld [vmem:[#allocation5 + $0x90] sm:$0xff]
    %v118 = vld [vmem:[#allocation5 + $0x98] sm:$0xff]
    %v119 = vld [vmem:[#allocation5 + $0xa0] sm:$0xff]
    %v120 = vld [vmem:[#allocation5 + $0xa8] sm:$0xff]
    %v121 = vld [vmem:[#allocation5 + $0xb0] sm:$0xff]
    %v122 = vld [vmem:[#allocation5 + $0xb8] sm:$0xff]
    %v123 = vld [vmem:[#allocation5 + $0xc0] sm:$0xff]
    %v124 = vld [vmem:[#allocation5 + $0xc8] sm:$0xff]
    %v125 = vld [vmem:[#allocation5 + $0xd0] sm:$0xff]
    %v126 = vld [vmem:[#allocation5 + $0xd8] sm:$0xff]
    %v127 = vld [vmem:[#allocation5 + $0xe0] sm:$0xff]
    %v128 = vld [vmem:[#allocation5 + $0xe8] sm:$0xff]
    %v129 = vld [vmem:[#allocation5 + $0xf0] sm:$0xff]
    %v130 = vld [vmem:[#allocation5 + $0xf8] sm:$0xff]
    %v131 = vld [vmem:[#allocation5 + $0x100] sm:$0xff]
    %v132 = vld [vmem:[#allocation5 + $0x108] sm:$0xff]
    %v133 = vld [vmem:[#allocation5 + $0x110] sm:$0xff]
    %v134 = vld [vmem:[#allocation5 + $0x118] sm:$0xff]
    %v135 = vld [vmem:[#allocation5 + $0x120] sm:$0xff]
    %v136 = vld [vmem:[#allocation5 + $0x128] sm:$0xff]
    %v137 = vld [vmem:[#allocation5 + $0x130] sm:$0xff]
    %v138 = vld [vmem:[#allocation5 + $0x138] sm:$0xff]
    %v139 = vld [vmem:[#allocation5 + $0x140] sm:$0xff]
    %v140 = vld [vmem:[#allocation5 + $0x148] sm:$0xff]
    %v141 = vld [vmem:[#allocation5 + $0x150] sm:$0xff]
    %v142 = vld [vmem:[#allocation5 + $0x158] sm:$0xff]
    %v143 = vld [vmem:[#allocation5 + $0x160] sm:$0xff]
    %v144 = vld [vmem:[#allocation5 + $0x168] sm:$0xff]
    %v145 = vld [vmem:[#allocation5 + $0x170] sm:$0xff]
    %v146 = vld [vmem:[#allocation5 + $0x178] sm:$0xff]
    %v147 = vld [vmem:[#allocation5 + $0x180] sm:$0xff]
    %v148 = vld [vmem:[#allocation5 + $0x188] sm:$0xff]
    %v149 = vld [vmem:[#allocation5 + $0x190] sm:$0xff]
    %v150 = vld [vmem:[#allocation5 + $0x198] sm:$0xff]
    %v151 = vld [vmem:[#allocation5 + $0x1a0] sm:$0xff]
    %v152 = vld [vmem:[#allocation5 + $0x1a8] sm:$0xff]
    %v153 = vld [vmem:[#allocation5 + $0x1b0] sm:$0xff]
    %v154 = vld [vmem:[#allocation5 + $0x1b8] sm:$0xff]
    %v155 = vld [vmem:[#allocation5 + $0x1c0] sm:$0xff]
    %v156 = vld [vmem:[#allocation5 + $0x1c8] sm:$0xff]
    %v157 = vld [vmem:[#allocation5 + $0x1d0] sm:$0xff]
    %v158 = vld [vmem:[#allocation5 + $0x1d8] sm:$0xff]
    %v159 = vld [vmem:[#allocation5 + $0x1e0] sm:$0xff]
    %v160 = vld [vmem:[#allocation5 + $0x1e8] sm:$0xff]
    %v161 = vld [vmem:[#allocation5 + $0x1f0] sm:$0xff]
    %v162 = vld [vmem:[#allocation5 + $0x1f8] sm:$0xff]
    %v163 = vld [vmem:[#allocation7] sm:$0xf]
    %v165 = vperm.slane %v163, 0
    %v166 = vperm.slane %v163, 1
    %v167 = vperm.slane %v163, 2
    %v168 = vperm.slane %v163, 3
    %v237 = vunpack.c.l.b16 %v99
    %v238 = vunpack.c.h.b16 %v99
    %v239 = vunpack.c.l.b16 %v100
    %v240 = vunpack.c.h.b16 %v100
    %v241 = vunpack.c.l.b16 %v101
    %v242 = vunpack.c.h.b16 %v101
    %v243 = vunpack.c.l.b16 %v102
    %v244 = vunpack.c.h.b16 %v102
    %v245 = vunpack.c.l.b16 %v103
    %v246 = vunpack.c.h.b16 %v103
    %v247 = vunpack.c.l.b16 %v104
    %v248 = vunpack.c.h.b16 %v104
    %v249 = vunpack.c.l.b16 %v105
    %v250 = vunpack.c.h.b16 %v105
    %v251 = vunpack.c.l.b16 %v106
    %v252 = vunpack.c.h.b16 %v106
    %v253 = vunpack.c.l.b16 %v107
    %v254 = vunpack.c.h.b16 %v107
    %v255 = vunpack.c.l.b16 %v108
    %v256 = vunpack.c.h.b16 %v108
    %v257 = vunpack.c.l.b16 %v109
    %v258 = vunpack.c.h.b16 %v109
    %v259 = vunpack.c.l.b16 %v110
    %v260 = vunpack.c.h.b16 %v110
    %v261 = vunpack.c.l.b16 %v111
    %v262 = vunpack.c.h.b16 %v111
    %v263 = vunpack.c.l.b16 %v112
    %v264 = vunpack.c.h.b16 %v112
    %v265 = vunpack.c.l.b16 %v113
    %v266 = vunpack.c.h.b16 %v113
    %v267 = vunpack.c.l.b16 %v114
    %v268 = vunpack.c.h.b16 %v114
    %v269 = vunpack.c.l.b16 %v115
    %v270 = vunpack.c.h.b16 %v115
    %v271 = vunpack.c.l.b16 %v116
    %v272 = vunpack.c.h.b16 %v116
    %v273 = vunpack.c.l.b16 %v117
    %v274 = vunpack.c.h.b16 %v117
    %v275 = vunpack.c.l.b16 %v118
    %v276 = vunpack.c.h.b16 %v118
    %v277 = vunpack.c.l.b16 %v119
    %v278 = vunpack.c.h.b16 %v119
    %v279 = vunpack.c.l.b16 %v120
    %v280 = vunpack.c.h.b16 %v120
    %v281 = vunpack.c.l.b16 %v121
    %v282 = vunpack.c.h.b16 %v121
    %v283 = vunpack.c.l.b16 %v122
    %v284 = vunpack.c.h.b16 %v122
    %v285 = vunpack.c.l.b16 %v123
    %v286 = vunpack.c.h.b16 %v123
    %v287 = vunpack.c.l.b16 %v124
    %v288 = vunpack.c.h.b16 %v124
    %v289 = vunpack.c.l.b16 %v125
    %v290 = vunpack.c.h.b16 %v125
    %v291 = vunpack.c.l.b16 %v126
    %v292 = vunpack.c.h.b16 %v126
    %v293 = vunpack.c.l.b16 %v127
    %v294 = vunpack.c.h.b16 %v127
    %v295 = vunpack.c.l.b16 %v128
    %v296 = vunpack.c.h.b16 %v128
    %v297 = vunpack.c.l.b16 %v129
    %v298 = vunpack.c.h.b16 %v129
    %v299 = vunpack.c.l.b16 %v130
    %v300 = vunpack.c.h.b16 %v130
    %v301 = vunpack.c.l.b16 %v131
    %v302 = vunpack.c.h.b16 %v131
    %v303 = vunpack.c.l.b16 %v132
    %v304 = vunpack.c.h.b16 %v132
    %v305 = vunpack.c.l.b16 %v133
    %v306 = vunpack.c.h.b16 %v133
    %v307 = vunpack.c.l.b16 %v134
    %v308 = vunpack.c.h.b16 %v134
    %v309 = vunpack.c.l.b16 %v135
    %v310 = vunpack.c.h.b16 %v135
    %v311 = vunpack.c.l.b16 %v136
    %v312 = vunpack.c.h.b16 %v136
    %v313 = vunpack.c.l.b16 %v137
    %v314 = vunpack.c.h.b16 %v137
    %v315 = vunpack.c.l.b16 %v138
    %v316 = vunpack.c.h.b16 %v138
    %v317 = vunpack.c.l.b16 %v139
    %v318 = vunpack.c.h.b16 %v139
    %v319 = vunpack.c.l.b16 %v140
    %v320 = vunpack.c.h.b16 %v140
    %v321 = vunpack.c.l.b16 %v141
    %v322 = vunpack.c.h.b16 %v141
    %v323 = vunpack.c.l.b16 %v142
    %v324 = vunpack.c.h.b16 %v142
    %v325 = vunpack.c.l.b16 %v143
    %v326 = vunpack.c.h.b16 %v143
    %v327 = vunpack.c.l.b16 %v144
    %v328 = vunpack.c.h.b16 %v144
    %v329 = vunpack.c.l.b16 %v145
    %v330 = vunpack.c.h.b16 %v145
    %v331 = vunpack.c.l.b16 %v146
    %v332 = vunpack.c.h.b16 %v146
    %v333 = vunpack.c.l.b16 %v147
    %v334 = vunpack.c.h.b16 %v147
    %v335 = vunpack.c.l.b16 %v148
    %v336 = vunpack.c.h.b16 %v148
    %v337 = vunpack.c.l.b16 %v149
    %v338 = vunpack.c.h.b16 %v149
    %v339 = vunpack.c.l.b16 %v150
    %v340 = vunpack.c.h.b16 %v150
    %v341 = vunpack.c.l.b16 %v151
    %v342 = vunpack.c.h.b16 %v151
    %v343 = vunpack.c.l.b16 %v152
    %v344 = vunpack.c.h.b16 %v152
    %v345 = vunpack.c.l.b16 %v153
    %v346 = vunpack.c.h.b16 %v153
    %v347 = vunpack.c.l.b16 %v154
    %v348 = vunpack.c.h.b16 %v154
    %v349 = vunpack.c.l.b16 %v155
    %v350 = vunpack.c.h.b16 %v155
    %v351 = vunpack.c.l.b16 %v156
    %v352 = vunpack.c.h.b16 %v156
    %v353 = vunpack.c.l.b16 %v157
    %v354 = vunpack.c.h.b16 %v157
    %v355 = vunpack.c.l.b16 %v158
    %v356 = vunpack.c.h.b16 %v158
    %v357 = vunpack.c.l.b16 %v159
    %v358 = vunpack.c.h.b16 %v159
    %v359 = vunpack.c.l.b16 %v160
    %v360 = vunpack.c.h.b16 %v160
    %v361 = vunpack.c.l.b16 %v161
    %v362 = vunpack.c.h.b16 %v161
    %v363 = vunpack.c.l.b16 %v162
    %v364 = vunpack.c.h.b16 %v162
    %v365 = vpack.c.b16 %v241, %v237
    %v366 = vpack.c.b16 %v242, %v238
    %v367 = vpack.c.b16 %v243, %v239
    %v368 = vpack.c.b16 %v244, %v240
    %v369 = vpack.c.b16 %v249, %v245
    %v370 = vpack.c.b16 %v250, %v246
    %v371 = vpack.c.b16 %v251, %v247
    %v372 = vpack.c.b16 %v252, %v248
    %v373 = vpack.c.b16 %v257, %v253
    %v374 = vpack.c.b16 %v258, %v254
    %v375 = vpack.c.b16 %v259, %v255
    %v376 = vpack.c.b16 %v260, %v256
    %v377 = vpack.c.b16 %v265, %v261
    %v378 = vpack.c.b16 %v266, %v262
    %v379 = vpack.c.b16 %v267, %v263
    %v380 = vpack.c.b16 %v268, %v264
    %v381 = vpack.c.b16 %v273, %v269
    %v382 = vpack.c.b16 %v274, %v270
    %v383 = vpack.c.b16 %v275, %v271
    %v384 = vpack.c.b16 %v276, %v272
    %v385 = vpack.c.b16 %v281, %v277
    %v386 = vpack.c.b16 %v282, %v278
    %v387 = vpack.c.b16 %v283, %v279
    %v388 = vpack.c.b16 %v284, %v280
    %v389 = vpack.c.b16 %v289, %v285
    %v390 = vpack.c.b16 %v290, %v286
    %v391 = vpack.c.b16 %v291, %v287
    %v392 = vpack.c.b16 %v292, %v288
    %v393 = vpack.c.b16 %v297, %v293
    %v394 = vpack.c.b16 %v298, %v294
    %v395 = vpack.c.b16 %v299, %v295
    %v396 = vpack.c.b16 %v300, %v296
    %v397 = vpack.c.b16 %v305, %v301
    %v398 = vpack.c.b16 %v306, %v302
    %v399 = vpack.c.b16 %v307, %v303
    %v400 = vpack.c.b16 %v308, %v304
    %v401 = vpack.c.b16 %v313, %v309
    %v402 = vpack.c.b16 %v314, %v310
    %v403 = vpack.c.b16 %v315, %v311
    %v404 = vpack.c.b16 %v316, %v312
    %v405 = vpack.c.b16 %v321, %v317
    %v406 = vpack.c.b16 %v322, %v318
    %v407 = vpack.c.b16 %v323, %v319
    %v408 = vpack.c.b16 %v324, %v320
    %v409 = vpack.c.b16 %v329, %v325
    %v410 = vpack.c.b16 %v330, %v326
    %v411 = vpack.c.b16 %v331, %v327
    %v412 = vpack.c.b16 %v332, %v328
    %v413 = vpack.c.b16 %v337, %v333
    %v414 = vpack.c.b16 %v338, %v334
    %v415 = vpack.c.b16 %v339, %v335
    %v416 = vpack.c.b16 %v340, %v336
    %v417 = vpack.c.b16 %v345, %v341
    %v418 = vpack.c.b16 %v346, %v342
    %v419 = vpack.c.b16 %v347, %v343
    %v420 = vpack.c.b16 %v348, %v344
    %v421 = vpack.c.b16 %v353, %v349
    %v422 = vpack.c.b16 %v354, %v350
    %v423 = vpack.c.b16 %v355, %v351
    %v424 = vpack.c.b16 %v356, %v352
    %v425 = vpack.c.b16 %v361, %v357
    %v426 = vpack.c.b16 %v362, %v358
    %v427 = vpack.c.b16 %v363, %v359
    %v428 = vpack.c.b16 %v364, %v360
    %493 = vmatpush.bf16.msra.mxu0 %v393
    %494 = vmatpush.bf16.msra.mxu0 %v389
    %495 = vmatpush.bf16.msra.mxu0 %v385
    %496 = vmatpush.bf16.msra.mxu0 %v381
    %497 = vmatpush.bf16.msra.mxu0 %v377
    %498 = vmatpush.bf16.msra.mxu0 %v373
    %499 = vmatpush.bf16.msra.mxu0 %v369
    %500 = vmatpush.bf16.msra.mxu0 %v365
    %501 = vmatmul.bf16.gmra.mxu0 %v97
    %v502 = vpop.f32.mrf.mxu0
    %v503 = vadd.f32 %v165, %v502
    %v504 = vpop.f32.mrf.mxu0
    %v505 = vadd.f32 %v165, %v504
    %506 = vdwg.mxu0
    %507 = vmatpush.bf16.msra.mxu0 %v425
    %508 = vmatpush.bf16.msra.mxu0 %v421
    %509 = vmatpush.bf16.msra.mxu0 %v417
    %510 = vmatpush.bf16.msra.mxu0 %v413
    %511 = vmatpush.bf16.msra.mxu0 %v409
    %512 = vmatpush.bf16.msra.mxu0 %v405
    %513 = vmatpush.bf16.msra.mxu0 %v401
    %514 = vmatpush.bf16.msra.mxu0 %v397
    %515 = vmatmul.bf16.gmra.mxu0 %v98
    %v516 = vpop.f32.mrf.mxu0
    %v517 = vadd.f32 %v503, %v516
    %v518 = vpop.f32.mrf.mxu0
    %v519 = vadd.f32 %v505, %v518
    %520 = vdwg.mxu0
    %521 = vmatpush.bf16.msra.mxu0 %v394
    %522 = vmatpush.bf16.msra.mxu0 %v390
    %523 = vmatpush.bf16.msra.mxu0 %v386
    %524 = vmatpush.bf16.msra.mxu0 %v382
    %525 = vmatpush.bf16.msra.mxu0 %v378
    %526 = vmatpush.bf16.msra.mxu0 %v374
    %527 = vmatpush.bf16.msra.mxu0 %v370
    %528 = vmatpush.bf16.msra.mxu0 %v366
    %529 = vmatmul.bf16.gmra.mxu0 %v97
    %v530 = vpop.f32.mrf.mxu0
    %v531 = vadd.f32 %v166, %v530
    %v532 = vpop.f32.mrf.mxu0
    %v533 = vadd.f32 %v166, %v532
    %534 = vdwg.mxu0
    %535 = vmatpush.bf16.msra.mxu0 %v426
    %536 = vmatpush.bf16.msra.mxu0 %v422
    %537 = vmatpush.bf16.msra.mxu0 %v418
    %538 = vmatpush.bf16.msra.mxu0 %v414
    %539 = vmatpush.bf16.msra.mxu0 %v410
    %540 = vmatpush.bf16.msra.mxu0 %v406
    %541 = vmatpush.bf16.msra.mxu0 %v402
    %542 = vmatpush.bf16.msra.mxu0 %v398
    %543 = vmatmul.bf16.gmra.mxu0 %v98
    %v544 = vpop.f32.mrf.mxu0
    %v545 = vadd.f32 %v531, %v544
    %v546 = vpop.f32.mrf.mxu0
    %v547 = vadd.f32 %v533, %v546
    %548 = vdwg.mxu0
    %549 = vmatpush.bf16.msra.mxu0 %v395
    %550 = vmatpush.bf16.msra.mxu0 %v391
    %551 = vmatpush.bf16.msra.mxu0 %v387
    %552 = vmatpush.bf16.msra.mxu0 %v383
    %553 = vmatpush.bf16.msra.mxu0 %v379
    %554 = vmatpush.bf16.msra.mxu0 %v375
    %555 = vmatpush.bf16.msra.mxu0 %v371
    %556 = vmatpush.bf16.msra.mxu0 %v367
    %557 = vmatmul.bf16.gmra.mxu0 %v97
    %v558 = vpop.f32.mrf.mxu0
    %v559 = vadd.f32 %v167, %v558
    %v560 = vpop.f32.mrf.mxu0
    %v561 = vadd.f32 %v167, %v560
    %562 = vdwg.mxu0
    %563 = vmatpush.bf16.msra.mxu0 %v427
    %564 = vmatpush.bf16.msra.mxu0 %v423
    %565 = vmatpush.bf16.msra.mxu0 %v419
    %566 = vmatpush.bf16.msra.mxu0 %v415
    %567 = vmatpush.bf16.msra.mxu0 %v411
    %568 = vmatpush.bf16.msra.mxu0 %v407
    %569 = vmatpush.bf16.msra.mxu0 %v403
    %570 = vmatpush.bf16.msra.mxu0 %v399
    %571 = vmatmul.bf16.gmra.mxu0 %v98
    %v572 = vpop.f32.mrf.mxu0
    %v573 = vadd.f32 %v559, %v572
    %v574 = vpop.f32.mrf.mxu0
    %v575 = vadd.f32 %v561, %v574
    %576 = vdwg.mxu0
    %577 = vmatpush.bf16.msra.mxu0 %v396
    %578 = vmatpush.bf16.msra.mxu0 %v392
    %579 = vmatpush.bf16.msra.mxu0 %v388
    %580 = vmatpush.bf16.msra.mxu0 %v384
    %581 = vmatpush.bf16.msra.mxu0 %v380
    %582 = vmatpush.bf16.msra.mxu0 %v376
    %583 = vmatpush.bf16.msra.mxu0 %v372
    %584 = vmatpush.bf16.msra.mxu0 %v368
    %585 = vmatmul.bf16.gmra.mxu0 %v97
    %v586 = vpop.f32.mrf.mxu0
    %v587 = vadd.f32 %v168, %v586
    %v588 = vpop.f32.mrf.mxu0
    %v589 = vadd.f32 %v168, %v588
    %590 = vdwg.mxu0
    %591 = vmatpush.bf16.msra.mxu0 %v428
    %592 = vmatpush.bf16.msra.mxu0 %v424
    %593 = vmatpush.bf16.msra.mxu0 %v420
    %594 = vmatpush.bf16.msra.mxu0 %v416
    %595 = vmatpush.bf16.msra.mxu0 %v412
    %596 = vmatpush.bf16.msra.mxu0 %v408
    %597 = vmatpush.bf16.msra.mxu0 %v404
    %598 = vmatpush.bf16.msra.mxu0 %v400
    %599 = vmatmul.bf16.gmra.mxu0 %v98
    %v600 = vpop.f32.mrf.mxu0
    %v601 = vadd.f32 %v587, %v600
    %v602 = vpop.f32.mrf.mxu0
    %v603 = vadd.f32 %v589, %v602
    %604 = vdwg.mxu0
    %v605 = vadd.f32 %v517, %v545
    %v606 = vadd.f32 %v605, %v573
    %v607 = vadd.f32 %v606, %v601
    %608 = vadd.xlane.f32.xlu0 %v607
    %v609 = vpop.xlane.xlu0 %608
    %v610 = vadd.f32 %v519, %v547
    %v611 = vadd.f32 %v610, %v575
    %v612 = vadd.f32 %v611, %v603
    %613 = vadd.xlane.f32.xlu0 %v612
    %v614 = vpop.xlane.xlu0 %613
    %v615 = vmul.f32 %v609, 0.001953125
    %v616 = vmul.f32 %v614, 0.001953125
    %v617 = vmul.f32 %v517, %v517
    %v618 = vmul.f32 %v545, %v545
    %v619 = vmul.f32 %v573, %v573
    %v620 = vmul.f32 %v601, %v601
    %v621 = vmul.f32 %v519, %v519
    %v622 = vmul.f32 %v547, %v547
    %v623 = vmul.f32 %v575, %v575
    %v624 = vmul.f32 %v603, %v603
    %v625 = vadd.f32 %v617, %v618
    %v626 = vadd.f32 %v625, %v619
    %v627 = vadd.f32 %v626, %v620
    %628 = vadd.xlane.f32.xlu0 %v627
    %v629 = vpop.xlane.xlu0 %628
    %v630 = vadd.f32 %v621, %v622
    %v631 = vadd.f32 %v630, %v623
    %v632 = vadd.f32 %v631, %v624
    %633 = vadd.xlane.f32.xlu0 %v632
    %v634 = vpop.xlane.xlu0 %633
    %v635 = vmul.f32 %v629, 0.001953125
    %v636 = vmul.f32 %v634, 0.001953125
    %v637 = vmul.f32 %v615, %v615
    %v638 = vmul.f32 %v616, %v616
    %v639 = vsub.f32 %v635, %v637
    %v640 = vsub.f32 %v636, %v638
    %v641 = vmax.f32 %v639, 0.0
    %v642 = vmax.f32 %v640, 0.0
    %v643 = vsub.f32 %v517, %v615
    %v644 = vsub.f32 %v545, %v615
    %v645 = vsub.f32 %v573, %v615
    %v646 = vsub.f32 %v601, %v615
    %v647 = vsub.f32 %v519, %v616
    %v648 = vsub.f32 %v547, %v616
    %v649 = vsub.f32 %v575, %v616
    %v650 = vsub.f32 %v603, %v616
    %v651 = vadd.f32 %v641, 1e-05
    %v652 = vadd.f32 %v642, 1e-05
    %v653 = vrsqrt.pop %v651
    %v654 = vmul.f32 %v653, %v651
    %v655 = vmul.f32 %v654, %v653
    %v656 = vmul.f32 0.5, %v655
    %v657 = vsub.f32 1.5, %v656
    %v658 = vmul.f32 %v653, %v657
    %vm659 = vweird.f32 %v651
    %vm660 = vweird.f32 %v653
    %vm661 = vmor %vm659, %vm660
    %v662 = vsel %vm661, %v653, %v658
    %v663 = vrsqrt.pop %v652
    %v664 = vmul.f32 %v663, %v652
    %v665 = vmul.f32 %v664, %v663
    %v666 = vmul.f32 0.5, %v665
    %v667 = vsub.f32 1.5, %v666
    %v668 = vmul.f32 %v663, %v667
    %vm669 = vweird.f32 %v652
    %vm670 = vweird.f32 %v663
    %vm671 = vmor %vm669, %vm670
    %v672 = vsel %vm671, %v663, %v668
    %v673 = vmul.f32 %v643, %v662
    %v674 = vmul.f32 %v644, %v662
    %v675 = vmul.f32 %v645, %v662
    %v676 = vmul.f32 %v646, %v662
    %v677 = vmul.f32 %v647, %v672
    %v678 = vmul.f32 %v648, %v672
    %v679 = vmul.f32 %v649, %v672
    %v680 = vmul.f32 %v650, %v672
    %v681 = vld [vmem:[#allocation8] sm:$0xf]
    %v683 = vperm.slane %v681, 0
    %v684 = vperm.slane %v681, 1
    %v685 = vperm.slane %v681, 2
    %v686 = vperm.slane %v681, 3
    %v691 = vmul.f32 %v673, %v683
    %v692 = vmul.f32 %v674, %v684
    %v693 = vmul.f32 %v675, %v685
    %v694 = vmul.f32 %v676, %v686
    %v695 = vmul.f32 %v677, %v683
    %v696 = vmul.f32 %v678, %v684
    %v697 = vmul.f32 %v679, %v685
    %v698 = vmul.f32 %v680, %v686
    %v699 = vld [vmem:[#allocation10] sm:$0xf]
    %v701 = vperm.slane %v699, 0
    %v702 = vperm.slane %v699, 1
    %v703 = vperm.slane %v699, 2
    %v704 = vperm.slane %v699, 3
    %v709 = vadd.f32 %v691, %v701
    %v710 = vadd.f32 %v692, %v702
    %v711 = vadd.f32 %v693, %v703
    %v712 = vadd.f32 %v694, %v704
    %v713 = vadd.f32 %v695, %v701
    %v714 = vadd.f32 %v696, %v702
    %v715 = vadd.f32 %v697, %v703
    %v716 = vadd.f32 %v698, %v704
    %717 = vst [vmem:[#allocation11] sm:$0xff] %v709
    %718 = vst [vmem:[#allocation11 + $0x8] sm:$0xff] %v710
    %719 = vst [vmem:[#allocation11 + $0x10] sm:$0xff] %v711
    %720 = vst [vmem:[#allocation11 + $0x18] sm:$0xff] %v712
    %721 = vst [vmem:[#allocation11 + $0x20] sm:$0xff] %v713
    %722 = vst [vmem:[#allocation11 + $0x28] sm:$0xff] %v714
    %723 = vst [vmem:[#allocation11 + $0x30] sm:$0xff] %v715
    %724 = vst [vmem:[#allocation11 + $0x38] sm:$0xff] %v716
    // Predicated region
    $region42: #{tpu_custom_call.1} parent=1 // pred_check
      _
    $region43: #{tpu_custom_call.1} parent=1 // pred_check_branch
      %726 = sbr.rel (0) target = $region45
    $region44: #{tpu_custom_call.1} parent=1 // pred_region
      %728 = vsyncadd [#allocation4], 0
      %s729 = sshll.u32 [#allocation11], 4
      %s730 = int_to_ptr.vmem [resolvable:$true] %s729
      %s731 = sshll.u32 %s5, 4
      %s732 = int_to_ptr.hbm [resolvable:$true] %s731
      %737 = dma.vmem_to_hbm [thread:$0]  %s730, 1024, %s732, [#allocation4], 512, 512, 32
    $region45: #{tpu_custom_call.1} parent=1 // pred_fallthru
      _
    // Predicated region
    $region46: #{tpu_custom_call.1} parent=1 // pred_check
      _
    $region47: #{tpu_custom_call.1} parent=1 // pred_check_branch
      %739 = sbr.rel (0) target = $region49
    $region48: #{tpu_custom_call.1} parent=1 // pred_region
      %741 = dma.done [#allocation4], 1024
    $region49: #{tpu_custom_call.1} parent=1 // pred_fallthru
      _
    %742 = vsyncpa [#allocation3], 1
    %743 = vsyncpa [#allocation6], 1
    %744 = vsyncpa [#allocation9], 1
    %745 = vsyncpa [#allocation4], 1

</llo_original>
